<compile_context>
chip_gen: v5e
topology: v5e:2x2
jax: 0.10.0
libtpu: 0.0.40
codegen_flags: <defaults>
</compile_context>

<pallas_src>
import jax
import jax.numpy as jnp
from jax.experimental import pallas as pl
from jax.experimental.pallas import tpu as pltpu


_LANE = 128
_SUBLANE = 8
_TILE_BUDGET_BYTES = 8 * 1024 * 1024    # target bytes per x tile (== per out tile)
_VMEM_LIMIT_BYTES = 48 * 1024 * 1024    # <= v7x 64 MiB physical; ample on v5e/v6e


def _round_up(n: int, m: int) -> int:
    return -(-n // m) * m


def _largest_divisor(n: int, cap: int, align: int = 1):
    """Largest d with d | n, d <= cap, d % align == 0; None if no such d."""
    cap = min(cap, n)
    for d in range(cap, 0, -1):
        if n % d == 0 and d % align == 0:
            return d
    return None


def _select_tiles(B: int, F: int, T: int, itemsize: int):
    """Pick (bb, tf, tt) block sizes for blocks x:(bb,tf,tt), times:(bb,1,tt)."""
    budget = max(1, _TILE_BUDGET_BYTES // itemsize)  # elements per x tile (padded)
    t_pad = _round_up(T, _LANE)
    f_pad = _round_up(F, _SUBLANE)

    if f_pad * t_pad <= budget:
        # Whole (F, T) slab per batch fits: block batches together so the grid
        # shrinks (small-F / large-B case) and every x/out block is a single
        # fully contiguous HBM region.
        tf, tt = F, T
        bb = _largest_divisor(B, max(1, budget // (f_pad * t_pad))) or 1
    elif _SUBLANE * t_pad <= budget:
        # Keep the full time axis (lane-dense, contiguous rows; `times` block
        # index is constant across the F grid axis so its DMA is skipped);
        # split only the feature axis on a sublane-aligned divisor.
        bb, tt = 1, T
        cap_f = budget // t_pad                       # >= 8 in this branch
        tf = _largest_divisor(F, cap_f, align=_SUBLANE) or F
    else:
        # Very large T: split the time axis on a lane-aligned divisor too.
        bb = 1
        tt = _largest_divisor(T, budget // _SUBLANE, align=_LANE) or T
        cap_f = max(_SUBLANE, budget // _round_up(tt, _LANE))
        tf = _largest_divisor(F, cap_f, align=_SUBLANE) or F
    return bb, tf, tt


def _make_tcoder_kernel(dt: float):
    dt = float(dt)

    def kernel(x_ref, t_ref, o_ref):
        # x_ref: (bb, tf, tt); t_ref: (bb, 1, tt) -> broadcast over features.
        # The divide only touches the small (bb, 1, tt) tile; it is kept as a
        # true divide (not * (1/dt)) to stay bit-exact with torch.div.
        tcodes = t_ref[...] / dt
        o_ref[...] = jnp.clip(x_ref[...] - tcodes, -1.0, 1.0)

    return kernel


def temporal_coder_linear(x: jax.Array, times: jax.Array, dt: float) -> jax.Array:
    """x: (B, F, T), times: (B, 1, T) -> clamp(x - times/dt, -1, 1), shape (B, F, T)."""
    B, F, T = x.shape
    assert times.shape == (B, 1, T), f"expected times shape {(B, 1, T)}, got {times.shape}"

    itemsize = jnp.dtype(x.dtype).itemsize
    bb, tf, tt = _select_tiles(B, F, T, itemsize)
    grid = (B // bb, F // tf, T // tt)

    cost = pl.CostEstimate(
        flops=3 * B * F * T + B * T,                         # sub + 2-op clamp + div
        transcendentals=0,
        bytes_accessed=(2 * B * F * T + B * T) * itemsize,   # x + out + times
    )

    return pl.pallas_call(
        _make_tcoder_kernel(dt),
        out_shape=jax.ShapeDtypeStruct((B, F, T), x.dtype),
        grid_spec=pl.GridSpec(
            grid=grid,
            in_specs=[
                pl.BlockSpec((bb, tf, tt), lambda b, f, t: (b, f, t)),
                # `times` block is independent of the F grid index; when tt == T
                # its block index is constant across the inner axes and Pallas
                # skips the (tiny) re-fetch.
                pl.BlockSpec((bb, 1, tt), lambda b, f, t: (b, 0, t)),
            ],
            out_specs=pl.BlockSpec((bb, tf, tt), lambda b, f, t: (b, f, t)),
        ),
        compiler_params=pltpu.CompilerParams(
            dimension_semantics=("parallel", "parallel", "parallel"),
            vmem_limit_bytes=_VMEM_LIMIT_BYTES,
        ),
        cost_estimate=cost,
    )(x, times)


def temporal_coder_linear_ref(x, times, dt):
    """Pure-JAX reference matching the PyTorch forward."""
    tcodes = times / dt
    return jnp.clip(x - jnp.broadcast_to(tcodes, x.shape), -1.0, 1.0)


if __name__ == "__main__":
    dt = 0.5            # module's tsize
    B, F, T = 2, 4, 16  # batch, feat_size, sequence length (small demo shapes)

    key = jax.random.PRNGKey(0)
    kx, kt = jax.random.split(key)
    x = jax.random.normal(kx, (B, F, T), dtype=jnp.float32)
    times = jax.random.uniform(kt, (B, 1, T), dtype=jnp.float32)

    out = jax.block_until_ready(temporal_coder_linear(x, times, dt))
    ref = temporal_coder_linear_ref(x, times, dt)

    assert out.shape == (B, F, T)
    assert jnp.allclose(out, ref, atol=1e-6), "mismatch vs reference"

    print("KERNEL_OK")
</pallas_src>

<mosaic_0001>
module attributes {stable_mosaic.version = 11 : i64} {
  func.func @kernel(%arg0: i32, %arg1: i32, %arg2: i32, %arg3: memref<2x4x16xf32, #tpu.memory_space<vmem>>, %arg4: memref<2x1x16xf32, #tpu.memory_space<vmem>>, %arg5: memref<2x4x16xf32, #tpu.memory_space<vmem>>) attributes {dimension_semantics = [#tpu.dimension_semantics<parallel>, #tpu.dimension_semantics<parallel>, #tpu.dimension_semantics<parallel>], iteration_bounds = array<i64: 1, 1, 1>, scalar_prefetch = 0 : i64, scratch_operands = 0 : i64, tpu.core_type = #tpu.core_type<tc>, window_params = [{transform_indices = @transform_0, window_bounds = array<i64: 2, 4, 16>}, {transform_indices = @transform_1, window_bounds = array<i64: 2, 1, 16>}, {transform_indices = @transform_2, window_bounds = array<i64: 2, 4, 16>}]} {
    %c0 = arith.constant 0 : index
    %c0_0 = arith.constant 0 : index
    %c0_1 = arith.constant 0 : index
    %0 = vector.load %arg4[%c0, %c0_0, %c0_1] : memref<2x1x16xf32, #tpu.memory_space<vmem>>, vector<2x1x16xf32>
    %cst = arith.constant 5.000000e-01 : f32
    %1 = vector.broadcast %cst : f32 to vector<2x1x16xf32>
    %2 = arith.divf %0, %1 : vector<2x1x16xf32>
    %c0_2 = arith.constant 0 : index
    %c0_3 = arith.constant 0 : index
    %c0_4 = arith.constant 0 : index
    %3 = vector.load %arg3[%c0_2, %c0_3, %c0_4] : memref<2x4x16xf32, #tpu.memory_space<vmem>>, vector<2x4x16xf32>
    %4 = vector.broadcast %2 : vector<2x1x16xf32> to vector<2x4x16xf32>
    %5 = arith.subf %3, %4 : vector<2x4x16xf32>
    %cst_5 = arith.constant -1.000000e+00 : f32
    %cst_6 = arith.constant 1.000000e+00 : f32
    %6 = vector.broadcast %cst_5 : f32 to vector<2x4x16xf32>
    %7 = arith.maximumf %6, %5 : vector<2x4x16xf32>
    %8 = vector.broadcast %cst_6 : f32 to vector<2x4x16xf32>
    %9 = arith.minimumf %8, %7 : vector<2x4x16xf32>
    %c0_7 = arith.constant 0 : index
    %c0_8 = arith.constant 0 : index
    %c0_9 = arith.constant 0 : index
    %10 = vector.load %arg5[%c0_7, %c0_8, %c0_9] : memref<2x4x16xf32, #tpu.memory_space<vmem>>, vector<2x4x16xf32>
    tpu.vector_store %arg5[%c0_7, %c0_8, %c0_9], %9 {strides = array<i32>} : memref<2x4x16xf32, #tpu.memory_space<vmem>>, vector<2x4x16xf32>,
    return
  }
  func.func @transform_0(%arg0: i32, %arg1: i32, %arg2: i32) -> (i32, i32, i32) {
    %c0_i32 = arith.constant 0 : i32
    return %arg0, %arg1, %arg2 : i32, i32, i32
  }
  func.func @transform_1(%arg0: i32, %arg1: i32, %arg2: i32) -> (i32, i32, i32) {
    %c0_i32 = arith.constant 0 : i32
    %c0_i32_0 = arith.constant 0 : i32
    return %arg0, %c0_i32, %arg2 : i32, i32, i32
  }
  func.func @transform_2(%arg0: i32, %arg1: i32, %arg2: i32) -> (i32, i32, i32) {
    %c0_i32 = arith.constant 0 : i32
    return %arg0, %arg1, %arg2 : i32, i32, i32
  }
}

</mosaic_0001>

<llo_original>
// kernel: tpu_custom_call.1
$region0: #{tpu_custom_call.1}
  #allocation0 [shape = 'u32[]', space=smem, size = 0x4, offset = 0x4, fixed_abs, tag = 'smem constant byte address 0x4 - core index']
  #allocation1 [shape = 'u32[72,128]{1,0:T(1,128)}', space=vmem, size = 0x9000, scoped, tag = 'internal scratch']
  %s0 = inlined_call_operand.hbm [shape: f32[2,4,16], index: 0, kind: input, shape index: {}]
  %s1 = inlined_call_operand.hbm [shape: f32[2,1,16], index: 1, kind: input, shape index: {}]
  %s2 = inlined_call_operand.hbm [shape: f32[2,4,16], index: 2, kind: output, shape index: {}]
  %s3 = sld [smem:[#allocation0]]
  $region26: #{tpu_custom_call.1} parent=0
    _
  %s5 = ssub.s32 1, %s3
  %s6 = scalar_select 0, %s5, %s3
  $region1: #{tpu_custom_call.1} parent=0
    #allocation2 [shape = 'u8[4096]{0}', space=vmem, size = 0x1000, scoped, tag = 'input window, operand 0, single buffered']
    #allocation3 [shape = 's32[1]{0}', space=sflag, size = 0x4, scoped, tag = 'scoped memory for tpu_custom_call.1']
    #allocation4 [shape = 's32[1]{0}', space=sflag, size = 0x4, scoped, tag = 'scoped memory for tpu_custom_call.1']
    #allocation5 [shape = 'u8[1024]{0}', space=vmem, size = 0x400, scoped, tag = 'input window, operand 1, single buffered']
    #allocation6 [shape = 's32[1]{0}', space=sflag, size = 0x4, scoped, tag = 'scoped memory for tpu_custom_call.1']
    #allocation7 [shape = 'u8[4096]{0}', space=vmem, size = 0x1000, scoped, tag = 'output window, operand 0, single buffered']
    %7 = vsyncpa [#allocation3], 0
    %8 = vsyncpa [#allocation6], 0
    %9 = vsyncpa [#allocation4], 0
    // Predicated region
    $region2: #{tpu_custom_call.1} parent=1 // pred_check
      _
    $region3: #{tpu_custom_call.1} parent=1 // pred_check_branch
      %11 = sbr.rel (0) target = $region5
    $region4: #{tpu_custom_call.1} parent=1 // pred_region
      %13 = vsyncadd [#allocation3], 0
      %s14 = sshll.u32 %s0, 4
      %s15 = int_to_ptr.hbm [resolvable:$true] %s14
      %s16 = sshll.u32 [#allocation2], 4
      %s17 = int_to_ptr.vmem [resolvable:$true] %s16
      %22 = dma.hbm_to_vmem [thread:$0]  %s15, 128, %s17, [#allocation3], 64, 64, 4
    $region5: #{tpu_custom_call.1} parent=1 // pred_fallthru
      _
    // Predicated region
    $region6: #{tpu_custom_call.1} parent=1 // pred_check
      _
    $region7: #{tpu_custom_call.1} parent=1 // pred_check_branch
      %24 = sbr.rel (0) target = $region9
    $region8: #{tpu_custom_call.1} parent=1 // pred_region
      %26 = vsyncadd [#allocation6], 0
      %s27 = sshll.u32 %s1, 4
      %s28 = int_to_ptr.hbm [resolvable:$true] %s27
      %s29 = sshll.u32 [#allocation5], 4
      %s30 = int_to_ptr.vmem [resolvable:$true] %s29
      %35 = dma.hbm_to_vmem [thread:$0]  %s28, 32, %s30, [#allocation6], 16, 16, 1
    $region9: #{tpu_custom_call.1} parent=1 // pred_fallthru
      _
    // Predicated region
    $region10: #{tpu_custom_call.1} parent=1 // pred_check
      _
    $region11: #{tpu_custom_call.1} parent=1 // pred_check_branch
      %37 = sbr.rel (0) target = $region13
    $region12: #{tpu_custom_call.1} parent=1 // pred_region
      %39 = dma.done [#allocation3], 128
    $region13: #{tpu_custom_call.1} parent=1 // pred_fallthru
      _
    // Predicated region
    $region14: #{tpu_custom_call.1} parent=1 // pred_check
      _
    $region15: #{tpu_custom_call.1} parent=1 // pred_check_branch
      %41 = sbr.rel (0) target = $region17
    $region16: #{tpu_custom_call.1} parent=1 // pred_region
      %43 = dma.done [#allocation6], 32
    $region17: #{tpu_custom_call.1} parent=1 // pred_fallthru
      _
    %v44 = vld [vmem:[#allocation5] sm:$0x1]
    %v45 = vld [vmem:[#allocation5 + $0x1] sm:$0x1]
    %v46 = vrcp.pop 0.5
    %v47 = vmul.f32 0.5, %v46
    %v48 = vsub.f32 1.0, %v47
    %v49 = vmul.f32 %v46, %v48
    %v50 = vadd.f32 %v46, %v49
    %vm51 = vweird.f32 %v46
    %v52 = vsel %vm51, %v46, %v50
    %v53 = vmul.f32 %v44, %v52
    %v54 = vmul.f32 %v45, %v52
    %v55 = vld [vmem:[#allocation2] sm:$0xf]
    %v56 = vld [vmem:[#allocation2 + $0x4] sm:$0xf]
    %v59 = vperm.slane %v53, 0
    %v60 = vperm.slane %v54, 0
    %v63 = vsub.f32 %v55, %v59
    %v64 = vsub.f32 %v56, %v60
    %v65 = vmax.f32 %v63, -1.0
    %v66 = vmax.f32 %v64, -1.0
    %v67 = vmin.f32 %v65, 1.0
    %v68 = vmin.f32 %v66, 1.0
    %vm69 = vcmask 125952
    %70 = vst.msk [vmem:[#allocation7] sm:$0xf] %vm69, %v67
    %71 = vst.msk [vmem:[#allocation7 + $0x4] sm:$0xf] %vm69, %v68
    // Predicated region
    $region18: #{tpu_custom_call.1} parent=1 // pred_check
      _
    $region19: #{tpu_custom_call.1} parent=1 // pred_check_branch
      %73 = sbr.rel (0) target = $region21
    $region20: #{tpu_custom_call.1} parent=1 // pred_region
      %75 = vsyncadd [#allocation4], 0
      %s76 = sshll.u32 [#allocation7], 4
      %s77 = int_to_ptr.vmem [resolvable:$true] %s76
      %s78 = sshll.u32 %s2, 4
      %s79 = int_to_ptr.hbm [resolvable:$true] %s78
      %84 = dma.vmem_to_hbm [thread:$0]  %s77, 128, %s79, [#allocation4], 64, 64, 4
    $region21: #{tpu_custom_call.1} parent=1 // pred_fallthru
      _
    // Predicated region
    $region22: #{tpu_custom_call.1} parent=1 // pred_check
      _
    $region23: #{tpu_custom_call.1} parent=1 // pred_check_branch
      %86 = sbr.rel (0) target = $region25
    $region24: #{tpu_custom_call.1} parent=1 // pred_region
      %88 = dma.done [#allocation4], 128
    $region25: #{tpu_custom_call.1} parent=1 // pred_fallthru
      _
    %89 = vsyncpa [#allocation3], 1
    %90 = vsyncpa [#allocation6], 1
    %91 = vsyncpa [#allocation4], 1

</llo_original>
